<compile_context>
chip_gen: v6e
topology: v6e:2x2x1
jax: 0.10.0
libtpu: 0.0.40
codegen_flags: <defaults>
</compile_context>

<pallas_src>
import functools

import jax
import jax.numpy as jnp
from jax.experimental import pallas as pl
from jax.experimental.pallas import tpu as pltpu


def _soft_hist_rbf_kernel(x_ref, c_ref, nw2_ref, o_ref, *, x_is_native):
    # c_ref  : (TF, B)      bin centers (conv bias)
    # nw2_ref: (TF, B)      -(bin width)^2, precomputed on host
    # o_ref  : (TF, B, TN)  lane-dense output block (lanes = examples)
    if x_is_native:
        # x_ref: (TN, TF) tile of x in its native (examples, features) layout.
        # Both dims are multiples of (8, 128), so this is an aligned XLU
        # transpose; the XLU slot has slack in this store/EUP-bound kernel.
        x = jnp.transpose(x_ref[...].astype(jnp.float32))        # (TF, TN)
    else:
        # x_ref: (TF, TN) feature-major tile (small-F host-relayout path).
        x = x_ref[...].astype(jnp.float32)                       # (TF, TN)
    c = c_ref[...]
    nw2 = nw2_ref[...]
    z = x[:, None, :] + c[:, :, None]                            # (TF, B, TN)  bin_centers_conv
    o_ref[...] = jnp.exp(nw2[:, :, None] * (z * z)).astype(o_ref.dtype)


def _round_up(v, m):
    return ((v + m - 1) // m) * m


@functools.lru_cache(maxsize=1)
def _vmem_capacity_bytes():
    # Generation-aware VMEM capacity (v5e/v6e: 128 MiB, v7x: 64 MiB per core).
    try:
        return int(pltpu.get_tpu_info().vmem_capacity_bytes)
    except Exception:
        return 64 << 20   # conservative floor (v7x-class physical VMEM per core)


def _best_example_tile(n_cols, cap=2048):
    """Example (lane) tile: a multiple of 128 that never exceeds n_cols, chosen to
    minimize wasted trailing coverage and preferring fewer grid steps on ties.
    Blocks therefore never overhang the array except as standard ragged edges."""
    hi = min((n_cols // 128) * 128, cap)
    best_tn, best_cover = 128, None
    tn = hi
    while tn >= 128:
        cover = -(-n_cols // tn) * tn
        if best_cover is None or cover < best_cover:
            best_tn, best_cover = tn, cover
        tn -= 128
    return best_tn


def _choose_tiles(f, n_cols, b, out_bytes, out_budget):
    """Returns (TF, TN, x_is_native)."""
    tn = _best_example_tile(n_cols)

    def fit_tn(tn_, tf_):
        if tf_ * b * tn_ * out_bytes <= out_budget:
            return tn_
        cap = (out_budget // (tf_ * b * out_bytes)) // 128 * 128
        return max(128, min(tn_, cap))

    if f < 128:
        # Feature dim too small for a 128-lane-aligned native block: take the
        # whole feature dim per step and feed x feature-major instead.
        return f, fit_tn(tn, f), False

    # Native (N, F) layout: feature axis tiles in 128-lane granules.
    tf_cap = out_budget // (b * tn * out_bytes)
    tf = max(128, min((tf_cap // 128) * 128, (f // 128) * 128))
    return tf, fit_tn(tn, tf), True


@functools.partial(jax.jit, static_argnums=(3,), static_argnames=("out_dtype",))
def soft_histogram_rbf(x, centers, widths, num_bins, out_dtype=jnp.float32):
    """x: (n_examples, n_features); centers/widths: flat (F*B,) in PyTorch param order.
    Returns flat (F*B*N,) array in PyTorch's flatten order (feature, bin, example).

    out_dtype=jnp.bfloat16 is the recommended fast path on HBM-writeback-bound
    parts (v5e/v6e): compute stays f32, only the store narrows.  The default
    stays float32 to match the PyTorch module exactly.
    """
    n, f = x.shape
    b = int(num_bins)
    out_bytes = jnp.dtype(out_dtype).itemsize
    x_bytes = jnp.dtype(x.dtype).itemsize

    # Tiny-N inputs (< 128 examples) would make every output store a masked
    # vst.msk (lane dim < 128): pad the example axis to one full lane group and
    # slice the (tiny) result afterwards.
    n_cols = n if n >= 128 else 128
    x_in = x if n_cols == n else jnp.pad(x, ((0, n_cols - n), (0, 0)))

    # Generation-aware per-step output budget + explicit scoped-VMEM limit.
    vmem_cap = _vmem_capacity_bytes()
    out_budget = (4 << 20) if vmem_cap <= (64 << 20) else (6 << 20)

    tf, tn, x_native = _choose_tiles(f, n_cols, b, out_bytes, out_budget)
    grid = (pl.cdiv(f, tf), pl.cdiv(n_cols, tn))   # example-tile axis innermost

    c = jnp.asarray(centers, jnp.float32).reshape(f, b)    # (F, B)
    w = jnp.asarray(widths, jnp.float32).reshape(f, b)     # (F, B)
    neg_w2 = -(w * w)                                      # abs + square folded on host

    if x_native:
        x_arr = x_in                                            # (n_cols, F)
        x_spec = pl.BlockSpec((tn, tf), lambda i, j: (j, i))    # transposed in-kernel
    else:
        # Small-F fallback: one cheap feature-major relayout of the (small) x.
        # TODO(synk): produce x feature-major upstream to skip this for F < 128.
        x_arr = x_in.T                                          # (F, n_cols)
        x_spec = pl.BlockSpec((tf, tn), lambda i, j: (i, j))

    # Double-buffered blocks + a conservative allowance for the (TF, B, TN) f32
    # intermediates of the elementwise chain.
    out_tile = tf * b * tn * out_bytes
    x_tile = tn * tf * x_bytes
    f32_tmp = tf * b * tn * 4
    needed = 2 * out_tile + 2 * x_tile + 3 * f32_tmp + 4 * tf * b * 4 + (4 << 20)
    vmem_limit = int(min(vmem_cap * 3 // 4, max(2 * needed, 48 << 20)))

    cost = pl.CostEstimate(
        flops=3 * f * b * n_cols,
        transcendentals=f * b * n_cols,
        bytes_accessed=f * n_cols * x_bytes + 2 * f * b * 4 + f * b * n_cols * out_bytes,
    )

    out = pl.pallas_call(
        functools.partial(_soft_hist_rbf_kernel, x_is_native=x_native),
        out_shape=jax.ShapeDtypeStruct((f, b, n_cols), out_dtype),
        grid=grid,
        in_specs=[
            x_spec,
            # Parameters keep block index (i, 0) across the inner example axis,
            # so they stay VMEM-resident (no re-DMA) over all example tiles.
            pl.BlockSpec((tf, b), lambda i, j: (i, 0)),
            pl.BlockSpec((tf, b), lambda i, j: (i, 0)),
        ],
        out_specs=pl.BlockSpec((tf, b, tn), lambda i, j: (i, 0, j)),
        compiler_params=pltpu.CompilerParams(
            # Both grid axes are fully independent (no accumulation), so they are
            # shardable across TensorCores on multi-core parts.
            # TODO(synk): evaluate pltpu.CORE_PARALLEL on the feature axis for
            # explicit dual-TC sharding on v7x.
            dimension_semantics=("parallel", "parallel"),
            vmem_limit_bytes=vmem_limit),
        cost_estimate=cost,
    )(x_arr, c, neg_w2)

    if n_cols != n:
        out = out[:, :, :n]
    # Row-major (F, B, N) flatten == PyTorch's channel-major flatten.
    # TODO(synk): add a custom_vjp if centers/widths must be trained through this
    # kernel (pallas_call is not differentiable by default).
    return out.reshape(-1)


def soft_histogram_rbf_reference(x, centers, widths, num_bins):
    """Pure-JAX reference mirroring the PyTorch forward exactly."""
    n, f = x.shape
    b = num_bins
    y = x.T.reshape(f, 1, n) + centers.reshape(f, b, 1)   # bin_centers_conv
    y = jnp.abs(y)
    y = y * widths.reshape(f, b, 1)                       # bin_widths_conv (bias=False)
    y = jnp.exp(-(y ** 2))
    return y.reshape(-1)


if __name__ == "__main__":
    # --- Small shapes consistent with the module's forward:
    #     SoftHistogramRBF(n_features=4, n_examples=16, num_bins=8) ---
    n_features, n_examples, num_bins = 4, 16, 8

    key = jax.random.PRNGKey(0)
    x = jax.random.uniform(key, (n_examples, n_features), dtype=jnp.float32)

    # Deterministic parameter init matching the PyTorch __init__:
    #   bias = cat(F * [-1/B * (arange(B) + 0.5)]), widths filled with 2*B
    bin_centers = -1.0 / num_bins * (jnp.arange(num_bins, dtype=jnp.float32) + 0.5)
    centers = jnp.tile(bin_centers, n_features)                           # (F*B,)
    widths = jnp.full((n_features * num_bins,), float(num_bins * 2),
                      dtype=jnp.float32)                                  # (F*B,)

    out = jax.block_until_ready(soft_histogram_rbf(x, centers, widths, num_bins))
    ref = soft_histogram_rbf_reference(x, centers, widths, num_bins)
    assert out.shape == (n_features * num_bins * n_examples,)
    assert jnp.allclose(out, ref, atol=1e-5, rtol=1e-5), "f32 output mismatch"

    # Recommended fast path on writeback-bound parts: bf16 stores, f32 compute.
    out_bf16 = jax.block_until_ready(
        soft_histogram_rbf(x, centers, widths, num_bins, out_dtype=jnp.bfloat16))
    assert jnp.allclose(out_bf16.astype(jnp.float32), ref, atol=1e-2, rtol=2e-2), \
        "bf16 output mismatch"

    # --- Small-F / mid-N shape: single full-F feature tile, ragged example axis
    #     (N = 1000 -> TN = 512, masked tail only on the final example tile). ---
    f2, n2, b2 = 20, 1000, 8
    k1, k2, k3 = jax.random.split(jax.random.PRNGKey(1), 3)
    x2 = jax.random.normal(k1, (n2, f2), dtype=jnp.float32)
    c2 = jax.random.normal(k2, (f2 * b2,), dtype=jnp.float32)
    w2 = jax.random.uniform(k3, (f2 * b2,), dtype=jnp.float32, minval=0.5, maxval=4.0)
    out2 = jax.block_until_ready(soft_histogram_rbf(x2, c2, w2, b2))
    ref2 = soft_histogram_rbf_reference(x2, c2, w2, b2)
    assert out2.shape == (f2 * b2 * n2,)
    assert jnp.allclose(out2, ref2, atol=1e-5, rtol=1e-5), "tiled output mismatch"

    # --- Large-F shape exercising the native-layout path (no host transpose of x,
    #     aligned in-kernel transpose), 128-granule feature tiling, and ragged
    #     edges on both grid axes (F = 200, N = 3000). ---
    f3, n3, b3 = 200, 3000, 8
    k4, k5, k6 = jax.random.split(jax.random.PRNGKey(2), 3)
    x3 = jax.random.normal(k4, (n3, f3), dtype=jnp.float32)
    c3 = jax.random.normal(k5, (f3 * b3,), dtype=jnp.float32)
    w3 = jax.random.uniform(k6, (f3 * b3,), dtype=jnp.float32, minval=0.5, maxval=4.0)
    out3 = jax.block_until_ready(soft_histogram_rbf(x3, c3, w3, b3))
    ref3 = soft_histogram_rbf_reference(x3, c3, w3, b3)
    assert out3.shape == (f3 * b3 * n3,)
    assert jnp.allclose(out3, ref3, atol=1e-5, rtol=1e-5), "native-path output mismatch"

    # NOTE: self.hist_pool (AvgPool1d) and the quantiles=True cumsum branch are
    # defined in __init__ but unused in the default forward path, so they are
    # intentionally not part of the kernel.
    print("KERNEL_OK")
</pallas_src>

<mosaic_0001>
module attributes {stable_mosaic.version = 11 : i64} {
  func.func @_soft_hist_rbf_kernel(%arg0: i32, %arg1: i32, %arg2: memref<4x128xf32, #tpu.memory_space<vmem>>, %arg3: memref<4x8xf32, #tpu.memory_space<vmem>>, %arg4: memref<4x8xf32, #tpu.memory_space<vmem>>, %arg5: memref<4x8x128xf32, #tpu.memory_space<vmem>>) attributes {dimension_semantics = [#tpu.dimension_semantics<parallel>, #tpu.dimension_semantics<parallel>], iteration_bounds = array<i64: 1, 1>, scalar_prefetch = 0 : i64, scratch_operands = 0 : i64, tpu.core_type = #tpu.core_type<tc>, window_params = [{transform_indices = @transform_0, window_bounds = array<i64: 4, 128>}, {transform_indices = @transform_1, window_bounds = array<i64: 4, 8>}, {transform_indices = @transform_2, window_bounds = array<i64: 4, 8>}, {transform_indices = @transform_3, window_bounds = array<i64: 4, 8, 128>}]} {
    %c0 = arith.constant 0 : index
    %c0_0 = arith.constant 0 : index
    %0 = vector.load %arg2[%c0, %c0_0] : memref<4x128xf32, #tpu.memory_space<vmem>>, vector<4x128xf32>
    %c0_1 = arith.constant 0 : index
    %c0_2 = arith.constant 0 : index
    %1 = vector.load %arg3[%c0_1, %c0_2] : memref<4x8xf32, #tpu.memory_space<vmem>>, vector<4x8xf32>
    %c0_3 = arith.constant 0 : index
    %c0_4 = arith.constant 0 : index
    %2 = vector.load %arg4[%c0_3, %c0_4] : memref<4x8xf32, #tpu.memory_space<vmem>>, vector<4x8xf32>
    %3 = vector.shape_cast %0 : vector<4x128xf32> to vector<4x1x128xf32>
    %4 = vector.shape_cast %1 : vector<4x8xf32> to vector<4x8x1xf32>
    %5 = vector.broadcast %3 : vector<4x1x128xf32> to vector<4x8x128xf32>
    %6 = vector.broadcast %4 : vector<4x8x1xf32> to vector<4x8x128xf32>
    %7 = arith.addf %5, %6 : vector<4x8x128xf32>
    %8 = vector.shape_cast %2 : vector<4x8xf32> to vector<4x8x1xf32>
    %9 = arith.mulf %7, %7 : vector<4x8x128xf32>
    %10 = vector.broadcast %8 : vector<4x8x1xf32> to vector<4x8x128xf32>
    %11 = arith.mulf %10, %9 : vector<4x8x128xf32>
    %12 = math.exp %11 : vector<4x8x128xf32>
    %c0_5 = arith.constant 0 : index
    %c0_6 = arith.constant 0 : index
    %c0_7 = arith.constant 0 : index
    %13 = vector.load %arg5[%c0_5, %c0_6, %c0_7] : memref<4x8x128xf32, #tpu.memory_space<vmem>>, vector<4x8x128xf32>
    tpu.vector_store %arg5[%c0_5, %c0_6, %c0_7], %12 {strides = array<i32>} : memref<4x8x128xf32, #tpu.memory_space<vmem>>, vector<4x8x128xf32>,
    return
  }
  func.func @transform_0(%arg0: i32, %arg1: i32) -> (i32, i32) {
    %c0_i32 = arith.constant 0 : i32
    return %arg0, %arg1 : i32, i32
  }
  func.func @transform_1(%arg0: i32, %arg1: i32) -> (i32, i32) {
    %c0_i32 = arith.constant 0 : i32
    %c0_i32_0 = arith.constant 0 : i32
    return %arg0, %c0_i32 : i32, i32
  }
  func.func @transform_2(%arg0: i32, %arg1: i32) -> (i32, i32) {
    %c0_i32 = arith.constant 0 : i32
    %c0_i32_0 = arith.constant 0 : i32
    return %arg0, %c0_i32 : i32, i32
  }
  func.func @transform_3(%arg0: i32, %arg1: i32) -> (i32, i32, i32) {
    %c0_i32 = arith.constant 0 : i32
    %c0_i32_0 = arith.constant 0 : i32
    return %arg0, %c0_i32, %arg1 : i32, i32, i32
  }
}

</mosaic_0001>

<llo_original>
// kernel: soft_histogram_rbf.1
$region0: #{soft_histogram_rbf.1}
  #allocation0 [shape = 'u32[]', space=smem, size = 0x4, offset = 0x4, fixed_abs, tag = 'smem constant byte address 0x4 - core index']
  #allocation1 [shape = 'u32[144,128]{1,0:T(1,128)}', space=vmem, size = 0x12000, scoped, tag = 'internal scratch']
  %s0 = inlined_call_operand.vmem [shape: f32[4,128], index: 0, kind: input, shape index: {}]
  %s1 = inlined_call_operand.vmem [shape: f32[4,8], index: 1, kind: input, shape index: {}]
  %s2 = inlined_call_operand.vmem [shape: f32[4,8], index: 2, kind: input, shape index: {}]
  %s3 = inlined_call_operand.vmem [shape: f32[4,8,128], index: 3, kind: output, shape index: {}]
  %s4 = sld [smem:[#allocation0]]
  $region22: #{soft_histogram_rbf.1} parent=0
    _
  %s6 = ssub.s32 1, %s4
  %s7 = scalar_select 0, %s6, %s4
  // Predicated region
  $region2: #{soft_histogram_rbf.1} parent=0 // pred_check
    _
  $region3: #{soft_histogram_rbf.1} parent=0 // pred_check_branch
    %9 = sbr.rel (0) target = $region5
  $region4: #{soft_histogram_rbf.1} parent=0 // pred_region
    _
  $region5: #{soft_histogram_rbf.1} parent=0 // pred_fallthru
    _
  // Predicated region
  $region6: #{soft_histogram_rbf.1} parent=0 // pred_check
    _
  $region7: #{soft_histogram_rbf.1} parent=0 // pred_check_branch
    %11 = sbr.rel (0) target = $region9
  $region8: #{soft_histogram_rbf.1} parent=0 // pred_region
    _
  $region9: #{soft_histogram_rbf.1} parent=0 // pred_fallthru
    _
  // Predicated region
  $region10: #{soft_histogram_rbf.1} parent=0 // pred_check
    _
  $region11: #{soft_histogram_rbf.1} parent=0 // pred_check_branch
    %13 = sbr.rel (0) target = $region13
  $region12: #{soft_histogram_rbf.1} parent=0 // pred_region
    _
  $region13: #{soft_histogram_rbf.1} parent=0 // pred_fallthru
    _
  %v14 = vld [vmem:[%s0] sm:$0xf]
  %v15 = vld [vmem:[%s1] sm:$0xf]
  %v16 = vld [vmem:[%s2] sm:$0xf]
  %v19 = vunpack.c.l.s4 1966171168
  %v20 = vunpack.c.0.s8 %v19
  %v21 = vlaneseq
  %v22 = vshrl.u32 %v21, 7
  %v23 = vsub.s32 %v20, %v22
  %v24 = vrot.slane %v14, %v23
  %v25 = vcombine.high %v24, %v24
  %v27 = vunpack.c.l.s4 1966171168
  %v28 = vunpack.c.0.s8 %v27
  %v29 = vlaneseq
  %v30 = vshrl.u32 %v29, 7
  %v31 = vsub.s32 %v28, %v30
  %v32 = vrot.slane %v24, %v31
  %v34 = vunpack.c.l.s4 1966171168
  %v35 = vunpack.c.0.s8 %v34
  %v36 = vlaneseq
  %v37 = vshrl.u32 %v36, 7
  %v38 = vsub.s32 %v35, %v37
  %v39 = vrot.slane %v25, %v38
  %v40 = vcombine.high %v32, %v32
  %v41 = vcombine.high %v39, %v39
  %v42 = vlaneseq
  %v43 = vshrl.u32 %v42, 7
  %v44 = vsub.s32 0, %v43
  %v45 = vrot.slane %v15, %v44
  %47 = vbcast.lane.b32.xlu0 %v45, 256
  %v48 = vpop.permute.xlu0 %47
  %v49 = vlaneseq
  %v50 = vshrl.u32 %v49, 7
  %v51 = vsub.s32 1, %v50
  %v52 = vrot.slane %v15, %v51
  %54 = vbcast.lane.b32.xlu0 %v52, 256
  %v55 = vpop.permute.xlu0 %54
  %v56 = vlaneseq
  %v57 = vshrl.u32 %v56, 7
  %v58 = vsub.s32 2, %v57
  %v59 = vrot.slane %v15, %v58
  %61 = vbcast.lane.b32.xlu0 %v59, 256
  %v62 = vpop.permute.xlu0 %61
  %v63 = vlaneseq
  %v64 = vshrl.u32 %v63, 7
  %v65 = vsub.s32 3, %v64
  %v66 = vrot.slane %v15, %v65
  %68 = vbcast.lane.b32.xlu0 %v66, 256
  %v69 = vpop.permute.xlu0 %68
  %v70 = vlaneseq
  %v71 = vshrl.u32 %v70, 7
  %v72 = vsub.s32 0, %v71
  %v73 = vrot.slane %v32, %v72
  %v74 = vlaneseq
  %v75 = vshrl.u32 %v74, 7
  %v76 = vsub.s32 0, %v75
  %v77 = vrot.slane %v39, %v76
  %v78 = vlaneseq
  %v79 = vshrl.u32 %v78, 7
  %v80 = vsub.s32 0, %v79
  %v81 = vrot.slane %v40, %v80
  %v82 = vlaneseq
  %v83 = vshrl.u32 %v82, 7
  %v84 = vsub.s32 0, %v83
  %v85 = vrot.slane %v41, %v84
  %v90 = vadd.f32 %v73, %v48
  %v91 = vadd.f32 %v77, %v55
  %v92 = vadd.f32 %v81, %v62
  %v93 = vadd.f32 %v85, %v69
  %v94 = vlaneseq
  %v95 = vshrl.u32 %v94, 7
  %v96 = vsub.s32 0, %v95
  %v97 = vrot.slane %v16, %v96
  %99 = vbcast.lane.b32.xlu0 %v97, 256
  %v100 = vpop.permute.xlu0 %99
  %v101 = vlaneseq
  %v102 = vshrl.u32 %v101, 7
  %v103 = vsub.s32 1, %v102
  %v104 = vrot.slane %v16, %v103
  %106 = vbcast.lane.b32.xlu0 %v104, 256
  %v107 = vpop.permute.xlu0 %106
  %v108 = vlaneseq
  %v109 = vshrl.u32 %v108, 7
  %v110 = vsub.s32 2, %v109
  %v111 = vrot.slane %v16, %v110
  %113 = vbcast.lane.b32.xlu0 %v111, 256
  %v114 = vpop.permute.xlu0 %113
  %v115 = vlaneseq
  %v116 = vshrl.u32 %v115, 7
  %v117 = vsub.s32 3, %v116
  %v118 = vrot.slane %v16, %v117
  %120 = vbcast.lane.b32.xlu0 %v118, 256
  %v121 = vpop.permute.xlu0 %120
  %v122 = vmul.f32 %v90, %v90
  %v123 = vmul.f32 %v91, %v91
  %v124 = vmul.f32 %v92, %v92
  %v125 = vmul.f32 %v93, %v93
  %v126 = vmul.f32 %v100, %v122
  %v127 = vmul.f32 %v107, %v123
  %v128 = vmul.f32 %v114, %v124
  %v129 = vmul.f32 %v121, %v125
  %v130 = vmul.f32 %v126, 1.442695
  %v131 = vpow.pop %v130
  %v132 = vmul.f32 %v127, 1.442695
  %v133 = vpow.pop %v132
  %v134 = vmul.f32 %v128, 1.442695
  %v135 = vpow.pop %v134
  %v136 = vmul.f32 %v129, 1.442695
  %v137 = vpow.pop %v136
  %138 = vst [vmem:[%s3] sm:$0xff] %v131
  %139 = vst [vmem:[%s3 + $0x8] sm:$0xff] %v133
  %140 = vst [vmem:[%s3 + $0x10] sm:$0xff] %v135
  %141 = vst [vmem:[%s3 + $0x18] sm:$0xff] %v137
  // Predicated region
  $region14: #{soft_histogram_rbf.1} parent=0 // pred_check
    _
  $region15: #{soft_histogram_rbf.1} parent=0 // pred_check_branch
    %143 = sbr.rel (0) target = $region17
  $region16: #{soft_histogram_rbf.1} parent=0 // pred_region
    _
  $region17: #{soft_histogram_rbf.1} parent=0 // pred_fallthru
    _
  // Predicated region
  $region18: #{soft_histogram_rbf.1} parent=0 // pred_check
    _
  $region19: #{soft_histogram_rbf.1} parent=0 // pred_check_branch
    %145 = sbr.rel (0) target = $region21
  $region20: #{soft_histogram_rbf.1} parent=0 // pred_region
    _
  $region21: #{soft_histogram_rbf.1} parent=0 // pred_fallthru
    _

</llo_original>
